<compile_context>
chip_gen: v6e
topology: v6e:2x2x1
jax: 0.10.0
libtpu: 0.0.40
codegen_flags: <defaults>
</compile_context>

<pallas_src>
import jax
import jax.numpy as jnp
from jax.experimental import pallas as pl
from jax.experimental.pallas import tpu as pltpu


def _silu(x):
    # SiLU(x) = x * sigmoid(x) = x * 0.5 * (1 + tanh(x/2)).
    # Single EUP push (tanh); the mul/adds land in the 4-wide VALU slots.
    return x * (0.5 * jnp.tanh(0.5 * x) + 0.5)


def _odefunc_kernel(y_ref,
                    w1_ref, b1_ref,
                    w2_ref, b2_ref,
                    w3_ref, b3_ref,
                    w4_ref, b4_ref,
                    o_ref):
    # Batch lives on the lane axis: y is (1, TB), activations are (H, TB).
    y = y_ref[...]                                            # (1, TB)

    # Layer 1 (in_features = 1): K=1 matmul == outer product -> pure VPU.
    h = _silu(w1_ref[...] * y + b1_ref[...])                  # (H,1)*(1,TB)+(H,1) -> (H,TB)

    # Layers 2 & 3: (H,H) @ (H,TB) on the MXU (PyTorch (out,in) weights as-is),
    # f32 accumulation.  If the wrapper passed bf16 weights, cast activations
    # to match; biases and SiLU stay f32.
    mxu_dtype = w2_ref.dtype
    h = jnp.dot(w2_ref[...], h.astype(mxu_dtype),
                preferred_element_type=jnp.float32) + b2_ref[...]
    h = _silu(h)
    h = jnp.dot(w3_ref[...], h.astype(mxu_dtype),
                preferred_element_type=jnp.float32) + b3_ref[...]
    h = _silu(h)

    # Layer 4 (out_features = 1): N=1 matmul -> weighted sublane reduction
    # (VPU + XLU), producing a lane-dense (1, TB) row (no masked stores).
    out = jnp.sum(h * w4_ref[...], axis=0, keepdims=True) + b4_ref[...]
    o_ref[...] = out.astype(o_ref.dtype)


def _num_tensorcores():
    """Best-effort detection: 2 TCs/chip on v7x, 1 on v5e/v6e.  Falls back to 1."""
    try:
        kind = jax.devices()[0].device_kind.lower()
    except Exception:
        return 1
    return 2 if "v7" in kind else 1


def _pick_tiling(B, num_cores, tile_cap=4096):
    """Lane-dense batch tile (multiple of 128) and grid size.

    Single TC (v5e/v6e): minimal number of (serial) grid steps.
    Multi TC (v7x):      grid_b a multiple of num_cores so the 'parallel'
                         grid axis shards evenly, with minimal zero padding.
    """
    if num_cores <= 1:
        tile_b = min(tile_cap, 128 * pl.cdiv(B, 128))
        grid_b = pl.cdiv(B, tile_b)
    else:
        per_core = pl.cdiv(B, num_cores)
        steps_per_core = pl.cdiv(per_core, tile_cap)
        grid_b = num_cores * steps_per_core
        tile_b = min(tile_cap, 128 * pl.cdiv(pl.cdiv(B, grid_b), 128))
    return tile_b, grid_b


def odefunc_forward(t, y, params, *, tile_b=None, mxu_bf16=False):
    """Pallas implementation of ODEFunc.forward(t, y) -> net(y).

    y: (B, 1) float32.  `t` is unused (matches the PyTorch module).
    params: PyTorch-layout weights w{1..4}: (out, in), biases b{1..4}: (out,).
    """
    del t  # unused, as in the reference module
    B, fin = y.shape
    assert fin == 1
    H = params["w2"].shape[0]

    if tile_b is None:
        tile_b, grid_b = _pick_tiling(B, _num_tensorcores())
    else:
        assert tile_b % 128 == 0
        grid_b = pl.cdiv(B, tile_b)
    b_pad = grid_b * tile_b

    # Batch-on-lanes layout: (B, 1) -> (1, B_pad).  Zero-padding handles ragged
    # batches; padded columns are independent and sliced off at the end.
    y_row = y.reshape(1, B)
    if b_pad != B:
        y_row = jnp.pad(y_row, ((0, 0), (0, b_pad - B)))

    mxu_dtype = jnp.bfloat16 if mxu_bf16 else jnp.float32
    w1 = params["w1"].reshape(H, 1)                 # (H, 1) column
    b1 = params["b1"].reshape(H, 1)
    w2 = params["w2"].astype(mxu_dtype)             # (H, H), PyTorch (out, in) as-is
    b2 = params["b2"].reshape(H, 1)
    w3 = params["w3"].astype(mxu_dtype)
    b3 = params["b3"].reshape(H, 1)
    w4 = params["w4"].reshape(H, 1)                 # PyTorch (1, H) -> (H, 1) column
    b4 = params["b4"].reshape(1, 1)

    full = lambda a: pl.BlockSpec(a.shape, lambda i: (0, 0))   # VMEM-resident weights

    cost = pl.CostEstimate(
        flops=int(b_pad * (4 * H * H + 16 * H + 2)),
        transcendentals=int(3 * H * b_pad),          # one tanh per SiLU element
        bytes_accessed=int(4 * (2 * b_pad + 2 * H * H + 6 * H + 1)),
    )

    out_row = pl.pallas_call(
        _odefunc_kernel,
        out_shape=jax.ShapeDtypeStruct((1, b_pad), jnp.float32),
        grid_spec=pltpu.PrefetchScalarGridSpec(
            num_scalar_prefetch=0,
            grid=(grid_b,),
            in_specs=[
                pl.BlockSpec((1, tile_b), lambda i: (0, i)),   # y tile (lane-dense)
                full(w1), full(b1),
                full(w2), full(b2),
                full(w3), full(b3),
                full(w4), full(b4),
            ],
            out_specs=pl.BlockSpec((1, tile_b), lambda i: (0, i)),
        ),
        compiler_params=pltpu.CompilerParams(
            dimension_semantics=("parallel",)),
        cost_estimate=cost,
    )(y_row, w1, b1, w2, b2, w3, b3, w4, b4)

    return out_row[:, :B].reshape(B, 1)


def init_params(key, hidden_dim=64):
    """nn.Linear-style init U(-1/sqrt(fan_in), 1/sqrt(fan_in)), PyTorch (out, in) layout."""
    dims = [(hidden_dim, 1), (hidden_dim, hidden_dim),
            (hidden_dim, hidden_dim), (1, hidden_dim)]
    params = {}
    for idx, (fout, fin) in enumerate(dims, start=1):
        key, kw, kb = jax.random.split(key, 3)
        bound = 1.0 / jnp.sqrt(jnp.float32(fin))
        params[f"w{idx}"] = jax.random.uniform(
            kw, (fout, fin), jnp.float32, minval=-bound, maxval=bound)
        params[f"b{idx}"] = jax.random.uniform(
            kb, (fout,), jnp.float32, minval=-bound, maxval=bound)
    return params


def _reference_forward(y, params):
    h = jax.nn.silu(y @ params["w1"].T + params["b1"])
    h = jax.nn.silu(h @ params["w2"].T + params["b2"])
    h = jax.nn.silu(h @ params["w3"].T + params["b3"])
    return h @ params["w4"].T + params["b4"]


if __name__ == "__main__":
    key = jax.random.PRNGKey(0)
    key, ky = jax.random.split(key)

    hidden_dim = 64
    batch = 200                               # ragged on purpose -> exercises padding
    y = jax.random.normal(ky, (batch, 1), jnp.float32)
    t = jnp.float32(0.0)                      # unused by forward, kept for API parity

    params = init_params(key, hidden_dim=hidden_dim)

    fwd = jax.jit(lambda tt, yy: odefunc_forward(tt, yy, params))
    out = jax.block_until_ready(fwd(t, y))

    ref = _reference_forward(y, params)
    assert out.shape == (batch, 1)
    # Exact (tanh-based) sigmoid in f32 -> tight tolerance.
    assert jnp.allclose(out, ref, atol=1e-4, rtol=1e-4), float(jnp.max(jnp.abs(out - ref)))

    print("KERNEL_OK")
</pallas_src>

<mosaic_0001>
module attributes {stable_mosaic.version = 11 : i64} {
  func.func @_odefunc_kernel(%arg0: i32, %arg1: memref<1x256xf32, #tpu.memory_space<vmem>>, %arg2: memref<64x1xf32, #tpu.memory_space<vmem>>, %arg3: memref<64x1xf32, #tpu.memory_space<vmem>>, %arg4: memref<64x64xf32, #tpu.memory_space<vmem>>, %arg5: memref<64x1xf32, #tpu.memory_space<vmem>>, %arg6: memref<64x64xf32, #tpu.memory_space<vmem>>, %arg7: memref<64x1xf32, #tpu.memory_space<vmem>>, %arg8: memref<64x1xf32, #tpu.memory_space<vmem>>, %arg9: memref<1x1xf32, #tpu.memory_space<vmem>>, %arg10: memref<1x256xf32, #tpu.memory_space<vmem>>) attributes {dimension_semantics = [#tpu.dimension_semantics<parallel>], iteration_bounds = array<i64: 1>, scalar_prefetch = 0 : i64, scratch_operands = 0 : i64, tpu.core_type = #tpu.core_type<tc>, window_params = [{transform_indices = @transform_0, window_bounds = array<i64: 1, 256>}, {pipeline_mode = #tpu.pipeline_mode<synchronous>, transform_indices = @transform_1, window_bounds = array<i64: 64, 1>}, {pipeline_mode = #tpu.pipeline_mode<synchronous>, transform_indices = @transform_2, window_bounds = array<i64: 64, 1>}, {pipeline_mode = #tpu.pipeline_mode<synchronous>, transform_indices = @transform_3, window_bounds = array<i64: 64, 64>}, {pipeline_mode = #tpu.pipeline_mode<synchronous>, transform_indices = @transform_4, window_bounds = array<i64: 64, 1>}, {pipeline_mode = #tpu.pipeline_mode<synchronous>, transform_indices = @transform_5, window_bounds = array<i64: 64, 64>}, {pipeline_mode = #tpu.pipeline_mode<synchronous>, transform_indices = @transform_6, window_bounds = array<i64: 64, 1>}, {pipeline_mode = #tpu.pipeline_mode<synchronous>, transform_indices = @transform_7, window_bounds = array<i64: 64, 1>}, {pipeline_mode = #tpu.pipeline_mode<synchronous>, transform_indices = @transform_8, window_bounds = array<i64: 1, 1>}, {transform_indices = @transform_9, window_bounds = array<i64: 1, 256>}]} {
    %c0 = arith.constant 0 : index
    %c0_0 = arith.constant 0 : index
    %0 = vector.load %arg1[%c0, %c0_0] : memref<1x256xf32, #tpu.memory_space<vmem>>, vector<1x256xf32>
    %c0_1 = arith.constant 0 : index
    %c0_2 = arith.constant 0 : index
    %1 = vector.load %arg2[%c0_1, %c0_2] : memref<64x1xf32, #tpu.memory_space<vmem>>, vector<64x1xf32>
    %2 = vector.broadcast %1 : vector<64x1xf32> to vector<64x256xf32>
    %3 = vector.broadcast %0 : vector<1x256xf32> to vector<64x256xf32>
    %4 = arith.mulf %2, %3 : vector<64x256xf32>
    %c0_3 = arith.constant 0 : index
    %c0_4 = arith.constant 0 : index
    %5 = vector.load %arg3[%c0_3, %c0_4] : memref<64x1xf32, #tpu.memory_space<vmem>>, vector<64x1xf32>
    %6 = vector.broadcast %5 : vector<64x1xf32> to vector<64x256xf32>
    %7 = arith.addf %4, %6 : vector<64x256xf32>
    %cst = arith.constant 5.000000e-01 : f32
    %8 = vector.broadcast %cst : f32 to vector<64x256xf32>
    %9 = arith.mulf %8, %7 : vector<64x256xf32>
    %10 = math.tanh %9 : vector<64x256xf32>
    %cst_5 = arith.constant 5.000000e-01 : f32
    %11 = vector.broadcast %cst_5 : f32 to vector<64x256xf32>
    %12 = arith.mulf %11, %10 : vector<64x256xf32>
    %cst_6 = arith.constant 5.000000e-01 : f32
    %13 = vector.broadcast %cst_6 : f32 to vector<64x256xf32>
    %14 = arith.addf %12, %13 : vector<64x256xf32>
    %15 = arith.mulf %7, %14 : vector<64x256xf32>
    %c0_7 = arith.constant 0 : index
    %c0_8 = arith.constant 0 : index
    %16 = vector.load %arg4[%c0_7, %c0_8] : memref<64x64xf32, #tpu.memory_space<vmem>>, vector<64x64xf32>
    %cst_9 = arith.constant dense<0.000000e+00> : vector<64x256xf32>
    %17 = tpu.matmul %16, %15, %cst_9 {dimension_numbers = #tpu.dot_dimension_numbers<[1], [0], [0], [1], [0, 0, 1, 1], [], []>} : vector<64x64xf32>, vector<64x256xf32>, vector<64x256xf32> -> vector<64x256xf32>
    %c0_10 = arith.constant 0 : index
    %c0_11 = arith.constant 0 : index
    %18 = vector.load %arg5[%c0_10, %c0_11] : memref<64x1xf32, #tpu.memory_space<vmem>>, vector<64x1xf32>
    %19 = vector.broadcast %18 : vector<64x1xf32> to vector<64x256xf32>
    %20 = arith.addf %17, %19 : vector<64x256xf32>
    %cst_12 = arith.constant 5.000000e-01 : f32
    %21 = vector.broadcast %cst_12 : f32 to vector<64x256xf32>
    %22 = arith.mulf %21, %20 : vector<64x256xf32>
    %23 = math.tanh %22 : vector<64x256xf32>
    %cst_13 = arith.constant 5.000000e-01 : f32
    %24 = vector.broadcast %cst_13 : f32 to vector<64x256xf32>
    %25 = arith.mulf %24, %23 : vector<64x256xf32>
    %cst_14 = arith.constant 5.000000e-01 : f32
    %26 = vector.broadcast %cst_14 : f32 to vector<64x256xf32>
    %27 = arith.addf %25, %26 : vector<64x256xf32>
    %28 = arith.mulf %20, %27 : vector<64x256xf32>
    %c0_15 = arith.constant 0 : index
    %c0_16 = arith.constant 0 : index
    %29 = vector.load %arg6[%c0_15, %c0_16] : memref<64x64xf32, #tpu.memory_space<vmem>>, vector<64x64xf32>
    %cst_17 = arith.constant dense<0.000000e+00> : vector<64x256xf32>
    %30 = tpu.matmul %29, %28, %cst_17 {dimension_numbers = #tpu.dot_dimension_numbers<[1], [0], [0], [1], [0, 0, 1, 1], [], []>} : vector<64x64xf32>, vector<64x256xf32>, vector<64x256xf32> -> vector<64x256xf32>
    %c0_18 = arith.constant 0 : index
    %c0_19 = arith.constant 0 : index
    %31 = vector.load %arg7[%c0_18, %c0_19] : memref<64x1xf32, #tpu.memory_space<vmem>>, vector<64x1xf32>
    %32 = vector.broadcast %31 : vector<64x1xf32> to vector<64x256xf32>
    %33 = arith.addf %30, %32 : vector<64x256xf32>
    %cst_20 = arith.constant 5.000000e-01 : f32
    %34 = vector.broadcast %cst_20 : f32 to vector<64x256xf32>
    %35 = arith.mulf %34, %33 : vector<64x256xf32>
    %36 = math.tanh %35 : vector<64x256xf32>
    %cst_21 = arith.constant 5.000000e-01 : f32
    %37 = vector.broadcast %cst_21 : f32 to vector<64x256xf32>
    %38 = arith.mulf %37, %36 : vector<64x256xf32>
    %cst_22 = arith.constant 5.000000e-01 : f32
    %39 = vector.broadcast %cst_22 : f32 to vector<64x256xf32>
    %40 = arith.addf %38, %39 : vector<64x256xf32>
    %41 = arith.mulf %33, %40 : vector<64x256xf32>
    %c0_23 = arith.constant 0 : index
    %c0_24 = arith.constant 0 : index
    %42 = vector.load %arg8[%c0_23, %c0_24] : memref<64x1xf32, #tpu.memory_space<vmem>>, vector<64x1xf32>
    %43 = vector.broadcast %42 : vector<64x1xf32> to vector<64x256xf32>
    %44 = arith.mulf %41, %43 : vector<64x256xf32>
    %cst_25 = arith.constant dense<0.000000e+00> : vector<256xf32>
    %45 = vector.multi_reduction <add>, %44, %cst_25 [0] : vector<64x256xf32> to vector<256xf32>
    %46 = vector.shape_cast %45 : vector<256xf32> to vector<1x256xf32>
    %c0_26 = arith.constant 0 : index
    %c0_27 = arith.constant 0 : index
    %47 = vector.load %arg9[%c0_26, %c0_27] : memref<1x1xf32, #tpu.memory_space<vmem>>, vector<1x1xf32>
    %48 = vector.broadcast %47 : vector<1x1xf32> to vector<1x256xf32>
    %49 = arith.addf %46, %48 : vector<1x256xf32>
    %c0_28 = arith.constant 0 : index
    %c0_29 = arith.constant 0 : index
    %50 = vector.load %arg10[%c0_28, %c0_29] : memref<1x256xf32, #tpu.memory_space<vmem>>, vector<1x256xf32>
    tpu.vector_store %arg10[%c0_28, %c0_29], %49 {strides = array<i32>} : memref<1x256xf32, #tpu.memory_space<vmem>>, vector<1x256xf32>,
    return
  }
  func.func @transform_0(%arg0: i32) -> (i32, i32) {
    %c0_i32 = arith.constant 0 : i32
    %c0_i32_0 = arith.constant 0 : i32
    return %c0_i32, %arg0 : i32, i32
  }
  func.func @transform_1(%arg0: i32) -> (i32, i32) {
    %c0_i32 = arith.constant 0 : i32
    %c0_i32_0 = arith.constant 0 : i32
    %c0_i32_1 = arith.constant 0 : i32
    return %c0_i32, %c0_i32_0 : i32, i32
  }
  func.func @transform_2(%arg0: i32) -> (i32, i32) {
    %c0_i32 = arith.constant 0 : i32
    %c0_i32_0 = arith.constant 0 : i32
    %c0_i32_1 = arith.constant 0 : i32
    return %c0_i32, %c0_i32_0 : i32, i32
  }
  func.func @transform_3(%arg0: i32) -> (i32, i32) {
    %c0_i32 = arith.constant 0 : i32
    %c0_i32_0 = arith.constant 0 : i32
    %c0_i32_1 = arith.constant 0 : i32
    return %c0_i32, %c0_i32_0 : i32, i32
  }
  func.func @transform_4(%arg0: i32) -> (i32, i32) {
    %c0_i32 = arith.constant 0 : i32
    %c0_i32_0 = arith.constant 0 : i32
    %c0_i32_1 = arith.constant 0 : i32
    return %c0_i32, %c0_i32_0 : i32, i32
  }
  func.func @transform_5(%arg0: i32) -> (i32, i32) {
    %c0_i32 = arith.constant 0 : i32
    %c0_i32_0 = arith.constant 0 : i32
    %c0_i32_1 = arith.constant 0 : i32
    return %c0_i32, %c0_i32_0 : i32, i32
  }
  func.func @transform_6(%arg0: i32) -> (i32, i32) {
    %c0_i32 = arith.constant 0 : i32
    %c0_i32_0 = arith.constant 0 : i32
    %c0_i32_1 = arith.constant 0 : i32
    return %c0_i32, %c0_i32_0 : i32, i32
  }
  func.func @transform_7(%arg0: i32) -> (i32, i32) {
    %c0_i32 = arith.constant 0 : i32
    %c0_i32_0 = arith.constant 0 : i32
    %c0_i32_1 = arith.constant 0 : i32
    return %c0_i32, %c0_i32_0 : i32, i32
  }
  func.func @transform_8(%arg0: i32) -> (i32, i32) {
    %c0_i32 = arith.constant 0 : i32
    %c0_i32_0 = arith.constant 0 : i32
    %c0_i32_1 = arith.constant 0 : i32
    return %c0_i32, %c0_i32_0 : i32, i32
  }
  func.func @transform_9(%arg0: i32) -> (i32, i32) {
    %c0_i32 = arith.constant 0 : i32
    %c0_i32_0 = arith.constant 0 : i32
    return %c0_i32, %arg0 : i32, i32
  }
}

</mosaic_0001>

<llo_original>
// kernel: _lambda_.1
$region0: #{_lambda_.1}
  #allocation0 [shape = 'u32[]', space=smem, size = 0x4, offset = 0x4, fixed_abs, tag = 'smem constant byte address 0x4 - core index']
  #allocation1 [shape = 'u32[144,128]{1,0:T(1,128)}', space=vmem, size = 0x12000, scoped, tag = 'internal scratch']
  #allocation2 [shape = 'f32[1,1]{1,0:T(1,128)S(1)}', space=vmem, size = 0x200, scoped, tag = 'scoped memory for _lambda_.1']
  %s0 = inlined_call_operand.vmem [shape: f32[1,256], index: 0, kind: input, shape index: {}]
  %s1 = inlined_call_operand.hbm [shape: f32[64,1], index: 1, kind: input, shape index: {}]
  %s2 = inlined_call_operand.hbm [shape: f32[64,1], index: 2, kind: input, shape index: {}]
  %s3 = inlined_call_operand.hbm [shape: f32[64,64], index: 3, kind: input, shape index: {}]
  %s4 = inlined_call_operand.hbm [shape: f32[64,1], index: 4, kind: input, shape index: {}]
  %s5 = inlined_call_operand.hbm [shape: f32[64,64], index: 5, kind: input, shape index: {}]
  %s6 = inlined_call_operand.hbm [shape: f32[64,1], index: 6, kind: input, shape index: {}]
  %s7 = inlined_call_operand.hbm [shape: f32[64,1], index: 7, kind: input, shape index: {}]
  %s8 = inlined_call_operand.<no memory space> [shape: f32[1,1], index: 8, kind: input, shape index: {}]
  %s9 = inlined_call_operand.vmem [shape: f32[1,256], index: 9, kind: output, shape index: {}]
  %s10 = sld [smem:[#allocation0]]
  $region74: #{_lambda_.1} parent=0
    _
  %s12 = ssub.s32 1, %s10
  %s13 = scalar_select 0, %s12, %s10
  %v14 = vstv %s8
  %15 = vst [vmem:[#allocation2] sm:$0x1] %v14
  $region1: #{_lambda_.1} parent=0
    #allocation3 [shape = 'u8[32768]{0}', space=vmem, size = 0x8000, scoped, tag = 'input window, operand 1, single buffered']
    #allocation4 [shape = 's32[1]{0}', space=sflag, size = 0x4, scoped, tag = 'scoped memory for _lambda_.1']
    #allocation5 [shape = 'u8[32768]{0}', space=vmem, size = 0x8000, scoped, tag = 'input window, operand 2, single buffered']
    #allocation6 [shape = 's32[1]{0}', space=sflag, size = 0x4, scoped, tag = 'scoped memory for _lambda_.1']
    #allocation7 [shape = 'u8[32768]{0}', space=vmem, size = 0x8000, scoped, tag = 'input window, operand 3, single buffered']
    #allocation8 [shape = 'u8[32768]{0}', space=vmem, size = 0x8000, scoped, tag = 'input window, operand 4, single buffered']
    #allocation9 [shape = 's32[1]{0}', space=sflag, size = 0x4, scoped, tag = 'scoped memory for _lambda_.1']
    #allocation10 [shape = 'u8[32768]{0}', space=vmem, size = 0x8000, scoped, tag = 'input window, operand 5, single buffered']
    #allocation11 [shape = 'u8[32768]{0}', space=vmem, size = 0x8000, scoped, tag = 'input window, operand 6, single buffered']
    #allocation12 [shape = 's32[1]{0}', space=sflag, size = 0x4, scoped, tag = 'scoped memory for _lambda_.1']
    #allocation13 [shape = 'u8[32768]{0}', space=vmem, size = 0x8000, scoped, tag = 'input window, operand 7, single buffered']
    %16 = vsyncpa [#allocation4], 0
    %17 = vsyncpa [#allocation6], 0
    %18 = vsyncpa [#allocation9], 0
    %19 = vsyncpa [#allocation12], 0
    // Predicated region
    $region2: #{_lambda_.1} parent=1 // pred_check
      _
    $region3: #{_lambda_.1} parent=1 // pred_check_branch
      %21 = sbr.rel (0) target = $region5
    $region4: #{_lambda_.1} parent=1 // pred_region
      _
    $region5: #{_lambda_.1} parent=1 // pred_fallthru
      _
    // Predicated region
    $region6: #{_lambda_.1} parent=1 // pred_check
      _
    $region7: #{_lambda_.1} parent=1 // pred_check_branch
      %23 = sbr.rel (0) target = $region9
    $region8: #{_lambda_.1} parent=1 // pred_region
      %s25 = ssub.s32 1024, 1024
      %26 = vsyncadd [#allocation4], %s25
      %s27 = sshll.u32 [#allocation3], 4
      %s28 = int_to_ptr.vmem [resolvable:$true] %s27
      %33 = dma.hbm_to_vmem [thread:$0]  %s1, 1024, %s28, [#allocation4], 128, 128, 8
    $region9: #{_lambda_.1} parent=1 // pred_fallthru
      _
    // Predicated region
    $region10: #{_lambda_.1} parent=1 // pred_check
      _
    $region11: #{_lambda_.1} parent=1 // pred_check_branch
      %35 = sbr.rel (0) target = $region13
    $region12: #{_lambda_.1} parent=1 // pred_region
      %s37 = ssub.s32 1024, 1024
      %38 = vsyncadd [#allocation6], %s37
      %s39 = sshll.u32 [#allocation5], 4
      %s40 = int_to_ptr.vmem [resolvable:$true] %s39
      %45 = dma.hbm_to_vmem [thread:$0]  %s2, 1024, %s40, [#allocation6], 128, 128, 8
    $region13: #{_lambda_.1} parent=1 // pred_fallthru
      _
    // Predicated region
    $region14: #{_lambda_.1} parent=1 // pred_check
      _
    $region15: #{_lambda_.1} parent=1 // pred_check_branch
      %47 = sbr.rel (0) target = $region17
    $region16: #{_lambda_.1} parent=1 // pred_region
      %s49 = ssub.s32 1024, 1024
      %50 = vsyncadd [#allocation6], %s49
      %s51 = sshll.u32 [#allocation7], 4
      %s52 = int_to_ptr.vmem [resolvable:$true] %s51
      %57 = dma.hbm_to_vmem [thread:$0]  %s3, 1024, %s52, [#allocation6], 128, 128, 8
    $region17: #{_lambda_.1} parent=1 // pred_fallthru
      _
    // Predicated region
    $region18: #{_lambda_.1} parent=1 // pred_check
      _
    $region19: #{_lambda_.1} parent=1 // pred_check_branch
      %59 = sbr.rel (0) target = $region21
    $region20: #{_lambda_.1} parent=1 // pred_region
      %s61 = ssub.s32 1024, 1024
      %62 = vsyncadd [#allocation9], %s61
      %s63 = sshll.u32 [#allocation8], 4
      %s64 = int_to_ptr.vmem [resolvable:$true] %s63
      %69 = dma.hbm_to_vmem [thread:$0]  %s4, 1024, %s64, [#allocation9], 128, 128, 8
    $region21: #{_lambda_.1} parent=1 // pred_fallthru
      _
    // Predicated region
    $region22: #{_lambda_.1} parent=1 // pred_check
      _
    $region23: #{_lambda_.1} parent=1 // pred_check_branch
      %71 = sbr.rel (0) target = $region25
    $region24: #{_lambda_.1} parent=1 // pred_region
      %s73 = ssub.s32 1024, 1024
      %74 = vsyncadd [#allocation9], %s73
      %s75 = sshll.u32 [#allocation10], 4
      %s76 = int_to_ptr.vmem [resolvable:$true] %s75
      %81 = dma.hbm_to_vmem [thread:$0]  %s5, 1024, %s76, [#allocation9], 128, 128, 8
    $region25: #{_lambda_.1} parent=1 // pred_fallthru
      _
    // Predicated region
    $region26: #{_lambda_.1} parent=1 // pred_check
      _
    $region27: #{_lambda_.1} parent=1 // pred_check_branch
      %83 = sbr.rel (0) target = $region29
    $region28: #{_lambda_.1} parent=1 // pred_region
      %s85 = ssub.s32 1024, 1024
      %86 = vsyncadd [#allocation12], %s85
      %s87 = sshll.u32 [#allocation11], 4
      %s88 = int_to_ptr.vmem [resolvable:$true] %s87
      %93 = dma.hbm_to_vmem [thread:$0]  %s6, 1024, %s88, [#allocation12], 128, 128, 8
    $region29: #{_lambda_.1} parent=1 // pred_fallthru
      _
    // Predicated region
    $region30: #{_lambda_.1} parent=1 // pred_check
      _
    $region31: #{_lambda_.1} parent=1 // pred_check_branch
      %95 = sbr.rel (0) target = $region33
    $region32: #{_lambda_.1} parent=1 // pred_region
      %s97 = ssub.s32 1024, 1024
      %98 = vsyncadd [#allocation12], %s97
      %s99 = sshll.u32 [#allocation13], 4
      %s100 = int_to_ptr.vmem [resolvable:$true] %s99
      %105 = dma.hbm_to_vmem [thread:$0]  %s7, 1024, %s100, [#allocation12], 128, 128, 8
    $region33: #{_lambda_.1} parent=1 // pred_fallthru
      _
    // Predicated region
    $region34: #{_lambda_.1} parent=1 // pred_check
      _
    $region35: #{_lambda_.1} parent=1 // pred_check_branch
      %107 = sbr.rel (0) target = $region37
    $region36: #{_lambda_.1} parent=1 // pred_region
      _
    $region37: #{_lambda_.1} parent=1 // pred_fallthru
      _
    // Predicated region
    $region38: #{_lambda_.1} parent=1 // pred_check
      _
    $region39: #{_lambda_.1} parent=1 // pred_check_branch
      %109 = sbr.rel (0) target = $region41
    $region40: #{_lambda_.1} parent=1 // pred_region
      %110 = dma.done [#allocation4], 1024
    $region41: #{_lambda_.1} parent=1 // pred_fallthru
      _
    // Predicated region
    $region42: #{_lambda_.1} parent=1 // pred_check
      _
    $region43: #{_lambda_.1} parent=1 // pred_check_branch
      %112 = sbr.rel (0) target = $region45
    $region44: #{_lambda_.1} parent=1 // pred_region
      %113 = dma.done [#allocation6], 1024
    $region45: #{_lambda_.1} parent=1 // pred_fallthru
      _
    // Predicated region
    $region46: #{_lambda_.1} parent=1 // pred_check
      _
    $region47: #{_lambda_.1} parent=1 // pred_check_branch
      %115 = sbr.rel (0) target = $region49
    $region48: #{_lambda_.1} parent=1 // pred_region
      %116 = dma.done [#allocation6], 1024
    $region49: #{_lambda_.1} parent=1 // pred_fallthru
      _
    // Predicated region
    $region50: #{_lambda_.1} parent=1 // pred_check
      _
    $region51: #{_lambda_.1} parent=1 // pred_check_branch
      %118 = sbr.rel (0) target = $region53
    $region52: #{_lambda_.1} parent=1 // pred_region
      %119 = dma.done [#allocation9], 1024
    $region53: #{_lambda_.1} parent=1 // pred_fallthru
      _
    // Predicated region
    $region54: #{_lambda_.1} parent=1 // pred_check
      _
    $region55: #{_lambda_.1} parent=1 // pred_check_branch
      %121 = sbr.rel (0) target = $region57
    $region56: #{_lambda_.1} parent=1 // pred_region
      %122 = dma.done [#allocation9], 1024
    $region57: #{_lambda_.1} parent=1 // pred_fallthru
      _
    // Predicated region
    $region58: #{_lambda_.1} parent=1 // pred_check
      _
    $region59: #{_lambda_.1} parent=1 // pred_check_branch
      %124 = sbr.rel (0) target = $region61
    $region60: #{_lambda_.1} parent=1 // pred_region
      %125 = dma.done [#allocation12], 1024
    $region61: #{_lambda_.1} parent=1 // pred_fallthru
      _
    // Predicated region
    $region62: #{_lambda_.1} parent=1 // pred_check
      _
    $region63: #{_lambda_.1} parent=1 // pred_check_branch
      %127 = sbr.rel (0) target = $region65
    $region64: #{_lambda_.1} parent=1 // pred_region
      %128 = dma.done [#allocation12], 1024
    $region65: #{_lambda_.1} parent=1 // pred_fallthru
      _
    %v129 = vld [vmem:[%s0] sm:$0x3]
    %v130 = vld [vmem:[#allocation3] sm:$0xff]
    %v131 = vld [vmem:[#allocation3 + $0x8] sm:$0xff]
    %v132 = vld [vmem:[#allocation3 + $0x10] sm:$0xff]
    %v133 = vld [vmem:[#allocation3 + $0x18] sm:$0xff]
    %v134 = vld [vmem:[#allocation3 + $0x20] sm:$0xff]
    %v135 = vld [vmem:[#allocation3 + $0x28] sm:$0xff]
    %v136 = vld [vmem:[#allocation3 + $0x30] sm:$0xff]
    %v137 = vld [vmem:[#allocation3 + $0x38] sm:$0xff]
    %139 = vset.pattern.permute.xlu0 0
    %140 = vperm.xlu0 %139, %v130
    %v141 = vpop.permute.xlu0 %140
    %144 = vset.pattern.permute.xlu0 0
    %145 = vperm.xlu0 %144, %v131
    %v146 = vpop.permute.xlu0 %145
    %149 = vset.pattern.permute.xlu0 0
    %150 = vperm.xlu0 %149, %v132
    %v151 = vpop.permute.xlu0 %150
    %154 = vset.pattern.permute.xlu0 0
    %155 = vperm.xlu0 %154, %v133
    %v156 = vpop.permute.xlu0 %155
    %159 = vset.pattern.permute.xlu0 0
    %160 = vperm.xlu0 %159, %v134
    %v161 = vpop.permute.xlu0 %160
    %164 = vset.pattern.permute.xlu0 0
    %165 = vperm.xlu0 %164, %v135
    %v166 = vpop.permute.xlu0 %165
    %169 = vset.pattern.permute.xlu0 0
    %170 = vperm.xlu0 %169, %v136
    %v171 = vpop.permute.xlu0 %170
    %174 = vset.pattern.permute.xlu0 0
    %175 = vperm.xlu0 %174, %v137
    %v176 = vpop.permute.xlu0 %175
    %v179 = vlaneseq
    %v180 = vshrl.u32 %v179, 7
    %v181 = vsub.s32 0, %v180
    %v182 = vrot.slane %v129, %v181
    %v183 = vlaneseq
    %v184 = vshrl.u32 %v183, 7
    %v185 = vsub.s32 1, %v184
    %v186 = vrot.slane %v129, %v185
    %v189 = vmul.f32 %v141, %v182
    %v190 = vmul.f32 %v141, %v186
    %v191 = vmul.f32 %v146, %v182
    %v192 = vmul.f32 %v146, %v186
    %v193 = vmul.f32 %v151, %v182
    %v194 = vmul.f32 %v151, %v186
    %v195 = vmul.f32 %v156, %v182
    %v196 = vmul.f32 %v156, %v186
    %v197 = vmul.f32 %v161, %v182
    %v198 = vmul.f32 %v161, %v186
    %v199 = vmul.f32 %v166, %v182
    %v200 = vmul.f32 %v166, %v186
    %v201 = vmul.f32 %v171, %v182
    %v202 = vmul.f32 %v171, %v186
    %v203 = vmul.f32 %v176, %v182
    %v204 = vmul.f32 %v176, %v186
    %v205 = vld [vmem:[#allocation5] sm:$0xff]
    %v206 = vld [vmem:[#allocation5 + $0x8] sm:$0xff]
    %v207 = vld [vmem:[#allocation5 + $0x10] sm:$0xff]
    %v208 = vld [vmem:[#allocation5 + $0x18] sm:$0xff]
    %v209 = vld [vmem:[#allocation5 + $0x20] sm:$0xff]
    %v210 = vld [vmem:[#allocation5 + $0x28] sm:$0xff]
    %v211 = vld [vmem:[#allocation5 + $0x30] sm:$0xff]
    %v212 = vld [vmem:[#allocation5 + $0x38] sm:$0xff]
    %214 = vset.pattern.permute.xlu0 0
    %215 = vperm.xlu0 %214, %v205
    %v216 = vpop.permute.xlu0 %215
    %219 = vset.pattern.permute.xlu0 0
    %220 = vperm.xlu0 %219, %v206
    %v221 = vpop.permute.xlu0 %220
    %224 = vset.pattern.permute.xlu0 0
    %225 = vperm.xlu0 %224, %v207
    %v226 = vpop.permute.xlu0 %225
    %229 = vset.pattern.permute.xlu0 0
    %230 = vperm.xlu0 %229, %v208
    %v231 = vpop.permute.xlu0 %230
    %234 = vset.pattern.permute.xlu0 0
    %235 = vperm.xlu0 %234, %v209
    %v236 = vpop.permute.xlu0 %235
    %239 = vset.pattern.permute.xlu0 0
    %240 = vperm.xlu0 %239, %v210
    %v241 = vpop.permute.xlu0 %240
    %244 = vset.pattern.permute.xlu0 0
    %245 = vperm.xlu0 %244, %v211
    %v246 = vpop.permute.xlu0 %245
    %249 = vset.pattern.permute.xlu0 0
    %250 = vperm.xlu0 %249, %v212
    %v251 = vpop.permute.xlu0 %250
    %v253 = vadd.f32 %v189, %v216
    %v254 = vadd.f32 %v190, %v216
    %v255 = vadd.f32 %v191, %v221
    %v256 = vadd.f32 %v192, %v221
    %v257 = vadd.f32 %v193, %v226
    %v258 = vadd.f32 %v194, %v226
    %v259 = vadd.f32 %v195, %v231
    %v260 = vadd.f32 %v196, %v231
    %v261 = vadd.f32 %v197, %v236
    %v262 = vadd.f32 %v198, %v236
    %v263 = vadd.f32 %v199, %v241
    %v264 = vadd.f32 %v200, %v241
    %v265 = vadd.f32 %v201, %v246
    %v266 = vadd.f32 %v202, %v246
    %v267 = vadd.f32 %v203, %v251
    %v268 = vadd.f32 %v204, %v251
    %v269 = vmul.f32 %v253, 0.5
    %v270 = vmul.f32 %v254, 0.5
    %v271 = vmul.f32 %v255, 0.5
    %v272 = vmul.f32 %v256, 0.5
    %v273 = vmul.f32 %v257, 0.5
    %v274 = vmul.f32 %v258, 0.5
    %v275 = vmul.f32 %v259, 0.5
    %v276 = vmul.f32 %v260, 0.5
    %v277 = vmul.f32 %v261, 0.5
    %v278 = vmul.f32 %v262, 0.5
    %v279 = vmul.f32 %v263, 0.5
    %v280 = vmul.f32 %v264, 0.5
    %v281 = vmul.f32 %v265, 0.5
    %v282 = vmul.f32 %v266, 0.5
    %v283 = vmul.f32 %v267, 0.5
    %v284 = vmul.f32 %v268, 0.5
    %v285 = vtanh.pop %v269
    %v286 = vtanh.pop %v270
    %v287 = vtanh.pop %v271
    %v288 = vtanh.pop %v272
    %v289 = vtanh.pop %v273
    %v290 = vtanh.pop %v274
    %v291 = vtanh.pop %v275
    %v292 = vtanh.pop %v276
    %v293 = vtanh.pop %v277
    %v294 = vtanh.pop %v278
    %v295 = vtanh.pop %v279
    %v296 = vtanh.pop %v280
    %v297 = vtanh.pop %v281
    %v298 = vtanh.pop %v282
    %v299 = vtanh.pop %v283
    %v300 = vtanh.pop %v284
    %v301 = vmul.f32 %v285, 0.5
    %v302 = vmul.f32 %v286, 0.5
    %v303 = vmul.f32 %v287, 0.5
    %v304 = vmul.f32 %v288, 0.5
    %v305 = vmul.f32 %v289, 0.5
    %v306 = vmul.f32 %v290, 0.5
    %v307 = vmul.f32 %v291, 0.5
    %v308 = vmul.f32 %v292, 0.5
    %v309 = vmul.f32 %v293, 0.5
    %v310 = vmul.f32 %v294, 0.5
    %v311 = vmul.f32 %v295, 0.5
    %v312 = vmul.f32 %v296, 0.5
    %v313 = vmul.f32 %v297, 0.5
    %v314 = vmul.f32 %v298, 0.5
    %v315 = vmul.f32 %v299, 0.5
    %v316 = vmul.f32 %v300, 0.5
    %v317 = vadd.f32 %v301, 0.5
    %v318 = vadd.f32 %v302, 0.5
    %v319 = vadd.f32 %v303, 0.5
    %v320 = vadd.f32 %v304, 0.5
    %v321 = vadd.f32 %v305, 0.5
    %v322 = vadd.f32 %v306, 0.5
    %v323 = vadd.f32 %v307, 0.5
    %v324 = vadd.f32 %v308, 0.5
    %v325 = vadd.f32 %v309, 0.5
    %v326 = vadd.f32 %v310, 0.5
    %v327 = vadd.f32 %v311, 0.5
    %v328 = vadd.f32 %v312, 0.5
    %v329 = vadd.f32 %v313, 0.5
    %v330 = vadd.f32 %v314, 0.5
    %v331 = vadd.f32 %v315, 0.5
    %v332 = vadd.f32 %v316, 0.5
    %v333 = vmul.f32 %v253, %v317
    %v334 = vmul.f32 %v254, %v318
    %v335 = vmul.f32 %v255, %v319
    %v336 = vmul.f32 %v256, %v320
    %v337 = vmul.f32 %v257, %v321
    %v338 = vmul.f32 %v258, %v322
    %v339 = vmul.f32 %v259, %v323
    %v340 = vmul.f32 %v260, %v324
    %v341 = vmul.f32 %v261, %v325
    %v342 = vmul.f32 %v262, %v326
    %v343 = vmul.f32 %v263, %v327
    %v344 = vmul.f32 %v264, %v328
    %v345 = vmul.f32 %v265, %v329
    %v346 = vmul.f32 %v266, %v330
    %v347 = vmul.f32 %v267, %v331
    %v348 = vmul.f32 %v268, %v332
    %v349 = vld [vmem:[#allocation7] sm:$0xff]
    %v350 = vld [vmem:[#allocation7 + $0x8] sm:$0xff]
    %v351 = vld [vmem:[#allocation7 + $0x10] sm:$0xff]
    %v352 = vld [vmem:[#allocation7 + $0x18] sm:$0xff]
    %v353 = vld [vmem:[#allocation7 + $0x20] sm:$0xff]
    %v354 = vld [vmem:[#allocation7 + $0x28] sm:$0xff]
    %v355 = vld [vmem:[#allocation7 + $0x30] sm:$0xff]
    %v356 = vld [vmem:[#allocation7 + $0x38] sm:$0xff]
    %v357 = vld [vmem:[#allocation8] sm:$0xff]
    %v358 = vld [vmem:[#allocation8 + $0x8] sm:$0xff]
    %v359 = vld [vmem:[#allocation8 + $0x10] sm:$0xff]
    %v360 = vld [vmem:[#allocation8 + $0x18] sm:$0xff]
    %v361 = vld [vmem:[#allocation8 + $0x20] sm:$0xff]
    %v362 = vld [vmem:[#allocation8 + $0x28] sm:$0xff]
    %v363 = vld [vmem:[#allocation8 + $0x30] sm:$0xff]
    %v364 = vld [vmem:[#allocation8 + $0x38] sm:$0xff]
    %366 = vset.pattern.permute.xlu0 0
    %367 = vperm.xlu0 %366, %v357
    %v368 = vpop.permute.xlu0 %367
    %371 = vset.pattern.permute.xlu0 0
    %372 = vperm.xlu0 %371, %v358
    %v373 = vpop.permute.xlu0 %372
    %376 = vset.pattern.permute.xlu0 0
    %377 = vperm.xlu0 %376, %v359
    %v378 = vpop.permute.xlu0 %377
    %381 = vset.pattern.permute.xlu0 0
    %382 = vperm.xlu0 %381, %v360
    %v383 = vpop.permute.xlu0 %382
    %386 = vset.pattern.permute.xlu0 0
    %387 = vperm.xlu0 %386, %v361
    %v388 = vpop.permute.xlu0 %387
    %391 = vset.pattern.permute.xlu0 0
    %392 = vperm.xlu0 %391, %v362
    %v393 = vpop.permute.xlu0 %392
    %396 = vset.pattern.permute.xlu0 0
    %397 = vperm.xlu0 %396, %v363
    %v398 = vpop.permute.xlu0 %397
    %401 = vset.pattern.permute.xlu0 0
    %402 = vperm.xlu0 %401, %v364
    %v403 = vpop.permute.xlu0 %402
    %vm405 = vcmask 523264
    %v407 = vsel %vm405, %v349, 0
    %v410 = vsel %vm405, %v350, 0
    %v413 = vsel %vm405, %v351, 0
    %v416 = vsel %vm405, %v352, 0
    %v419 = vsel %vm405, %v353, 0
    %v422 = vsel %vm405, %v354, 0
    %v425 = vsel %vm405, %v355, 0
    %v428 = vsel %vm405, %v356, 0
    %430 = vmatprep.subr.mxu0 0.0
    %431 = vmatpush1.msra.mxu0 0.0
    %432 = vmatprep.subr.mxu0 0.0
    %433 = vmatpush1.msra.mxu0 0.0
    %434 = vmatprep.subr.mxu0 0.0
    %435 = vmatpush1.msra.mxu0 0.0
    %436 = vmatprep.subr.mxu0 0.0
    %437 = vmatpush1.msra.mxu0 0.0
    %438 = vmatprep.subr.mxu0 0.0
    %439 = vmatpush1.msra.mxu0 0.0
    %440 = vmatprep.subr.mxu0 0.0
    %441 = vmatpush1.msra.mxu0 0.0
    %442 = vmatprep.subr.mxu0 0.0
    %443 = vmatpush1.msra.mxu0 0.0
    %444 = vmatprep.subr.mxu0 0.0
    %445 = vmatpush1.msra.mxu0 0.0
    %446 = vmatprep.subr.mxu0 %v348
    %447 = vmatpush1.msra.mxu0 %v347
    %448 = vmatprep.subr.mxu0 %v346
    %449 = vmatpush1.msra.mxu0 %v345
    %450 = vmatprep.subr.mxu0 %v344
    %451 = vmatpush1.msra.mxu0 %v343
    %452 = vmatprep.subr.mxu0 %v342
    %453 = vmatpush1.msra.mxu0 %v341
    %454 = vmatprep.subr.mxu0 %v340
    %455 = vmatpush1.msra.mxu0 %v339
    %456 = vmatprep.subr.mxu0 %v338
    %457 = vmatpush1.msra.mxu0 %v337
    %458 = vmatprep.subr.mxu0 %v336
    %459 = vmatpush1.msra.mxu0 %v335
    %460 = vmatprep.subr.mxu0 %v334
    %461 = vmatpush1.msra.mxu0 %v333
    %462 = vmatprep.subr.mxu0 0.0
    %463 = vmatpush2.msra.mxu0 0.0
    %464 = vmatprep.subr.mxu0 0.0
    %465 = vmatpush2.msra.mxu0 0.0
    %466 = vmatprep.subr.mxu0 0.0
    %467 = vmatpush2.msra.mxu0 0.0
    %468 = vmatprep.subr.mxu0 0.0
    %469 = vmatpush2.msra.mxu0 0.0
    %470 = vmatprep.subr.mxu0 0.0
    %471 = vmatpush2.msra.mxu0 0.0
    %472 = vmatprep.subr.mxu0 0.0
    %473 = vmatpush2.msra.mxu0 0.0
    %474 = vmatprep.subr.mxu0 0.0
    %475 = vmatpush2.msra.mxu0 0.0
    %476 = vmatprep.subr.mxu0 0.0
    %477 = vmatpush2.msra.mxu0 0.0
    %478 = vmatprep.subr.mxu0 0.0
    %479 = vmatpush2.msra.mxu0 0.0
    %480 = vmatprep.subr.mxu0 0.0
    %481 = vmatpush2.msra.mxu0 0.0
    %482 = vmatprep.subr.mxu0 0.0
    %483 = vmatpush2.msra.mxu0 0.0
    %484 = vmatprep.subr.mxu0 0.0
    %485 = vmatpush2.msra.mxu0 0.0
    %486 = vmatprep.subr.mxu0 0.0
    %487 = vmatpush2.msra.mxu0 0.0
    %488 = vmatprep.subr.mxu0 0.0
    %489 = vmatpush2.msra.mxu0 0.0
    %490 = vmatprep.subr.mxu0 0.0
    %491 = vmatpush2.msra.mxu0 0.0
    %492 = vmatprep.subr.mxu0 0.0
    %493 = vmatpush2.msra.mxu0 0.0
    %494 = vmatprep.mubr.f32.mxu0 0.0
    %495 = vmatmul.mubr.f32.gmra.mxu0 %v407
    %v496 = vpop.f32.mrf.mxu0
    %v497 = vadd.f32 %v368, %v496
    %v498 = vpop.f32.mrf.mxu0
    %v499 = vadd.f32 %v368, %v498
    %500 = vmatprep.mubr.f32.mxu0 0.0
    %501 = vmatmul.mubr.f32.gmra.mxu0 %v410
    %v502 = vpop.f32.mrf.mxu0
    %v503 = vadd.f32 %v373, %v502
    %v504 = vpop.f32.mrf.mxu0
    %v505 = vadd.f32 %v373, %v504
    %506 = vmatprep.mubr.f32.mxu0 0.0
    %507 = vmatmul.mubr.f32.gmra.mxu0 %v413
    %v508 = vpop.f32.mrf.mxu0
    %v509 = vadd.f32 %v378, %v508
    %v510 = vpop.f32.mrf.mxu0
    %v511 = vadd.f32 %v378, %v510
    %512 = vmatprep.mubr.f32.mxu0 0.0
    %513 = vmatmul.mubr.f32.gmra.mxu0 %v416
    %v514 = vpop.f32.mrf.mxu0
    %v515 = vadd.f32 %v383, %v514
    %v516 = vpop.f32.mrf.mxu0
    %v517 = vadd.f32 %v383, %v516
    %518 = vmatprep.mubr.f32.mxu0 0.0
    %519 = vmatmul.mubr.f32.gmra.mxu0 %v419
    %v520 = vpop.f32.mrf.mxu0
    %v521 = vadd.f32 %v388, %v520
    %v522 = vpop.f32.mrf.mxu0
    %v523 = vadd.f32 %v388, %v522
    %524 = vmatprep.mubr.f32.mxu0 0.0
    %525 = vmatmul.mubr.f32.gmra.mxu0 %v422
    %v526 = vpop.f32.mrf.mxu0
    %v527 = vadd.f32 %v393, %v526
    %v528 = vpop.f32.mrf.mxu0
    %v529 = vadd.f32 %v393, %v528
    %530 = vmatprep.mubr.f32.mxu0 0.0
    %531 = vmatmul.mubr.f32.gmra.mxu0 %v425
    %v532 = vpop.f32.mrf.mxu0
    %v533 = vadd.f32 %v398, %v532
    %v534 = vpop.f32.mrf.mxu0
    %v535 = vadd.f32 %v398, %v534
    %536 = vmatprep.mubr.f32.mxu0 0.0
    %537 = vmatmul.mubr.f32.gmra.mxu0 %v428
    %v538 = vpop.f32.mrf.mxu0
    %v539 = vadd.f32 %v403, %v538
    %v540 = vpop.f32.mrf.mxu0
    %v541 = vadd.f32 %v403, %v540
    %542 = vdwg.mxu0
    %v543 = vmul.f32 %v497, 0.5
    %v544 = vmul.f32 %v499, 0.5
    %v545 = vmul.f32 %v503, 0.5
    %v546 = vmul.f32 %v505, 0.5
    %v547 = vmul.f32 %v509, 0.5
    %v548 = vmul.f32 %v511, 0.5
    %v549 = vmul.f32 %v515, 0.5
    %v550 = vmul.f32 %v517, 0.5
    %v551 = vmul.f32 %v521, 0.5
    %v552 = vmul.f32 %v523, 0.5
    %v553 = vmul.f32 %v527, 0.5
    %v554 = vmul.f32 %v529, 0.5
    %v555 = vmul.f32 %v533, 0.5
    %v556 = vmul.f32 %v535, 0.5
    %v557 = vmul.f32 %v539, 0.5
    %v558 = vmul.f32 %v541, 0.5
    %v559 = vtanh.pop %v543
    %v560 = vtanh.pop %v544
    %v561 = vtanh.pop %v545
    %v562 = vtanh.pop %v546
    %v563 = vtanh.pop %v547
    %v564 = vtanh.pop %v548
    %v565 = vtanh.pop %v549
    %v566 = vtanh.pop %v550
    %v567 = vtanh.pop %v551
    %v568 = vtanh.pop %v552
    %v569 = vtanh.pop %v553
    %v570 = vtanh.pop %v554
    %v571 = vtanh.pop %v555
    %v572 = vtanh.pop %v556
    %v573 = vtanh.pop %v557
    %v574 = vtanh.pop %v558
    %v575 = vmul.f32 %v559, 0.5
    %v576 = vmul.f32 %v560, 0.5
    %v577 = vmul.f32 %v561, 0.5
    %v578 = vmul.f32 %v562, 0.5
    %v579 = vmul.f32 %v563, 0.5
    %v580 = vmul.f32 %v564, 0.5
    %v581 = vmul.f32 %v565, 0.5
    %v582 = vmul.f32 %v566, 0.5
    %v583 = vmul.f32 %v567, 0.5
    %v584 = vmul.f32 %v568, 0.5
    %v585 = vmul.f32 %v569, 0.5
    %v586 = vmul.f32 %v570, 0.5
    %v587 = vmul.f32 %v571, 0.5
    %v588 = vmul.f32 %v572, 0.5
    %v589 = vmul.f32 %v573, 0.5
    %v590 = vmul.f32 %v574, 0.5
    %v591 = vadd.f32 %v575, 0.5
    %v592 = vadd.f32 %v576, 0.5
    %v593 = vadd.f32 %v577, 0.5
    %v594 = vadd.f32 %v578, 0.5
    %v595 = vadd.f32 %v579, 0.5
    %v596 = vadd.f32 %v580, 0.5
    %v597 = vadd.f32 %v581, 0.5
    %v598 = vadd.f32 %v582, 0.5
    %v599 = vadd.f32 %v583, 0.5
    %v600 = vadd.f32 %v584, 0.5
    %v601 = vadd.f32 %v585, 0.5
    %v602 = vadd.f32 %v586, 0.5
    %v603 = vadd.f32 %v587, 0.5
    %v604 = vadd.f32 %v588, 0.5
    %v605 = vadd.f32 %v589, 0.5
    %v606 = vadd.f32 %v590, 0.5
    %v607 = vmul.f32 %v497, %v591
    %v608 = vmul.f32 %v499, %v592
    %v609 = vmul.f32 %v503, %v593
    %v610 = vmul.f32 %v505, %v594
    %v611 = vmul.f32 %v509, %v595
    %v612 = vmul.f32 %v511, %v596
    %v613 = vmul.f32 %v515, %v597
    %v614 = vmul.f32 %v517, %v598
    %v615 = vmul.f32 %v521, %v599
    %v616 = vmul.f32 %v523, %v600
    %v617 = vmul.f32 %v527, %v601
    %v618 = vmul.f32 %v529, %v602
    %v619 = vmul.f32 %v533, %v603
    %v620 = vmul.f32 %v535, %v604
    %v621 = vmul.f32 %v539, %v605
    %v622 = vmul.f32 %v541, %v606
    %v623 = vld [vmem:[#allocation10] sm:$0xff]
    %v624 = vld [vmem:[#allocation10 + $0x8] sm:$0xff]
    %v625 = vld [vmem:[#allocation10 + $0x10] sm:$0xff]
    %v626 = vld [vmem:[#allocation10 + $0x18] sm:$0xff]
    %v627 = vld [vmem:[#allocation10 + $0x20] sm:$0xff]
    %v628 = vld [vmem:[#allocation10 + $0x28] sm:$0xff]
    %v629 = vld [vmem:[#allocation10 + $0x30] sm:$0xff]
    %v630 = vld [vmem:[#allocation10 + $0x38] sm:$0xff]
    %v631 = vld [vmem:[#allocation11] sm:$0xff]
    %v632 = vld [vmem:[#allocation11 + $0x8] sm:$0xff]
    %v633 = vld [vmem:[#allocation11 + $0x10] sm:$0xff]
    %v634 = vld [vmem:[#allocation11 + $0x18] sm:$0xff]
    %v635 = vld [vmem:[#allocation11 + $0x20] sm:$0xff]
    %v636 = vld [vmem:[#allocation11 + $0x28] sm:$0xff]
    %v637 = vld [vmem:[#allocation11 + $0x30] sm:$0xff]
    %v638 = vld [vmem:[#allocation11 + $0x38] sm:$0xff]
    %640 = vset.pattern.permute.xlu0 0
    %641 = vperm.xlu0 %640, %v631
    %v642 = vpop.permute.xlu0 %641
    %645 = vset.pattern.permute.xlu0 0
    %646 = vperm.xlu0 %645, %v632
    %v647 = vpop.permute.xlu0 %646
    %650 = vset.pattern.permute.xlu0 0
    %651 = vperm.xlu0 %650, %v633
    %v652 = vpop.permute.xlu0 %651
    %655 = vset.pattern.permute.xlu0 0
    %656 = vperm.xlu0 %655, %v634
    %v657 = vpop.permute.xlu0 %656
    %660 = vset.pattern.permute.xlu0 0
    %661 = vperm.xlu0 %660, %v635
    %v662 = vpop.permute.xlu0 %661
    %665 = vset.pattern.permute.xlu0 0
    %666 = vperm.xlu0 %665, %v636
    %v667 = vpop.permute.xlu0 %666
    %670 = vset.pattern.permute.xlu0 0
    %671 = vperm.xlu0 %670, %v637
    %v672 = vpop.permute.xlu0 %671
    %675 = vset.pattern.permute.xlu0 0
    %676 = vperm.xlu0 %675, %v638
    %v677 = vpop.permute.xlu0 %676
    %v680 = vsel %vm405, %v623, 0
    %v683 = vsel %vm405, %v624, 0
    %v686 = vsel %vm405, %v625, 0
    %v689 = vsel %vm405, %v626, 0
    %v692 = vsel %vm405, %v627, 0
    %v695 = vsel %vm405, %v628, 0
    %v698 = vsel %vm405, %v629, 0
    %v701 = vsel %vm405, %v630, 0
    %703 = vmatprep.subr.mxu0 0.0
    %704 = vmatpush1.msra.mxu0 0.0
    %705 = vmatprep.subr.mxu0 0.0
    %706 = vmatpush1.msra.mxu0 0.0
    %707 = vmatprep.subr.mxu0 0.0
    %708 = vmatpush1.msra.mxu0 0.0
    %709 = vmatprep.subr.mxu0 0.0
    %710 = vmatpush1.msra.mxu0 0.0
    %711 = vmatprep.subr.mxu0 0.0
    %712 = vmatpush1.msra.mxu0 0.0
    %713 = vmatprep.subr.mxu0 0.0
    %714 = vmatpush1.msra.mxu0 0.0
    %715 = vmatprep.subr.mxu0 0.0
    %716 = vmatpush1.msra.mxu0 0.0
    %717 = vmatprep.subr.mxu0 0.0
    %718 = vmatpush1.msra.mxu0 0.0
    %719 = vmatprep.subr.mxu0 %v622
    %720 = vmatpush1.msra.mxu0 %v621
    %721 = vmatprep.subr.mxu0 %v620
    %722 = vmatpush1.msra.mxu0 %v619
    %723 = vmatprep.subr.mxu0 %v618
    %724 = vmatpush1.msra.mxu0 %v617
    %725 = vmatprep.subr.mxu0 %v616
    %726 = vmatpush1.msra.mxu0 %v615
    %727 = vmatprep.subr.mxu0 %v614
    %728 = vmatpush1.msra.mxu0 %v613
    %729 = vmatprep.subr.mxu0 %v612
    %730 = vmatpush1.msra.mxu0 %v611
    %731 = vmatprep.subr.mxu0 %v610
    %732 = vmatpush1.msra.mxu0 %v609
    %733 = vmatprep.subr.mxu0 %v608
    %734 = vmatpush1.msra.mxu0 %v607
    %735 = vmatprep.subr.mxu0 0.0
    %736 = vmatpush2.msra.mxu0 0.0
    %737 = vmatprep.subr.mxu0 0.0
    %738 = vmatpush2.msra.mxu0 0.0
    %739 = vmatprep.subr.mxu0 0.0
    %740 = vmatpush2.msra.mxu0 0.0
    %741 = vmatprep.subr.mxu0 0.0
    %742 = vmatpush2.msra.mxu0 0.0
    %743 = vmatprep.subr.mxu0 0.0
    %744 = vmatpush2.msra.mxu0 0.0
    %745 = vmatprep.subr.mxu0 0.0
    %746 = vmatpush2.msra.mxu0 0.0
    %747 = vmatprep.subr.mxu0 0.0
    %748 = vmatpush2.msra.mxu0 0.0
    %749 = vmatprep.subr.mxu0 0.0
    %750 = vmatpush2.msra.mxu0 0.0
    %751 = vmatprep.subr.mxu0 0.0
    %752 = vmatpush2.msra.mxu0 0.0
    %753 = vmatprep.subr.mxu0 0.0
    %754 = vmatpush2.msra.mxu0 0.0
    %755 = vmatprep.subr.mxu0 0.0
    %756 = vmatpush2.msra.mxu0 0.0
    %757 = vmatprep.subr.mxu0 0.0
    %758 = vmatpush2.msra.mxu0 0.0
    %759 = vmatprep.subr.mxu0 0.0
    %760 = vmatpush2.msra.mxu0 0.0
    %761 = vmatprep.subr.mxu0 0.0
    %762 = vmatpush2.msra.mxu0 0.0
    %763 = vmatprep.subr.mxu0 0.0
    %764 = vmatpush2.msra.mxu0 0.0
    %765 = vmatprep.subr.mxu0 0.0
    %766 = vmatpush2.msra.mxu0 0.0
    %767 = vmatprep.mubr.f32.mxu0 0.0
    %768 = vmatmul.mubr.f32.gmra.mxu0 %v680
    %v769 = vpop.f32.mrf.mxu0
    %v770 = vadd.f32 %v642, %v769
    %v771 = vpop.f32.mrf.mxu0
    %v772 = vadd.f32 %v642, %v771
    %773 = vmatprep.mubr.f32.mxu0 0.0
    %774 = vmatmul.mubr.f32.gmra.mxu0 %v683
    %v775 = vpop.f32.mrf.mxu0
    %v776 = vadd.f32 %v647, %v775
    %v777 = vpop.f32.mrf.mxu0
    %v778 = vadd.f32 %v647, %v777
    %779 = vmatprep.mubr.f32.mxu0 0.0
    %780 = vmatmul.mubr.f32.gmra.mxu0 %v686
    %v781 = vpop.f32.mrf.mxu0
    %v782 = vadd.f32 %v652, %v781
    %v783 = vpop.f32.mrf.mxu0
    %v784 = vadd.f32 %v652, %v783
    %785 = vmatprep.mubr.f32.mxu0 0.0
    %786 = vmatmul.mubr.f32.gmra.mxu0 %v689
    %v787 = vpop.f32.mrf.mxu0
    %v788 = vadd.f32 %v657, %v787
    %v789 = vpop.f32.mrf.mxu0
    %v790 = vadd.f32 %v657, %v789
    %791 = vmatprep.mubr.f32.mxu0 0.0
    %792 = vmatmul.mubr.f32.gmra.mxu0 %v692
    %v793 = vpop.f32.mrf.mxu0
    %v794 = vadd.f32 %v662, %v793
    %v795 = vpop.f32.mrf.mxu0
    %v796 = vadd.f32 %v662, %v795
    %797 = vmatprep.mubr.f32.mxu0 0.0
    %798 = vmatmul.mubr.f32.gmra.mxu0 %v695
    %v799 = vpop.f32.mrf.mxu0
    %v800 = vadd.f32 %v667, %v799
    %v801 = vpop.f32.mrf.mxu0
    %v802 = vadd.f32 %v667, %v801
    %803 = vmatprep.mubr.f32.mxu0 0.0
    %804 = vmatmul.mubr.f32.gmra.mxu0 %v698
    %v805 = vpop.f32.mrf.mxu0
    %v806 = vadd.f32 %v672, %v805
    %v807 = vpop.f32.mrf.mxu0
    %v808 = vadd.f32 %v672, %v807
    %809 = vmatprep.mubr.f32.mxu0 0.0
    %810 = vmatmul.mubr.f32.gmra.mxu0 %v701
    %v811 = vpop.f32.mrf.mxu0
    %v812 = vadd.f32 %v677, %v811
    %v813 = vpop.f32.mrf.mxu0
    %v814 = vadd.f32 %v677, %v813
    %815 = vdwg.mxu0
    %v816 = vmul.f32 %v770, 0.5
    %v817 = vmul.f32 %v772, 0.5
    %v818 = vmul.f32 %v776, 0.5
    %v819 = vmul.f32 %v778, 0.5
    %v820 = vmul.f32 %v782, 0.5
    %v821 = vmul.f32 %v784, 0.5
    %v822 = vmul.f32 %v788, 0.5
    %v823 = vmul.f32 %v790, 0.5
    %v824 = vmul.f32 %v794, 0.5
    %v825 = vmul.f32 %v796, 0.5
    %v826 = vmul.f32 %v800, 0.5
    %v827 = vmul.f32 %v802, 0.5
    %v828 = vmul.f32 %v806, 0.5
    %v829 = vmul.f32 %v808, 0.5
    %v830 = vmul.f32 %v812, 0.5
    %v831 = vmul.f32 %v814, 0.5
    %v832 = vtanh.pop %v816
    %v833 = vtanh.pop %v817
    %v834 = vtanh.pop %v818
    %v835 = vtanh.pop %v819
    %v836 = vtanh.pop %v820
    %v837 = vtanh.pop %v821
    %v838 = vtanh.pop %v822
    %v839 = vtanh.pop %v823
    %v840 = vtanh.pop %v824
    %v841 = vtanh.pop %v825
    %v842 = vtanh.pop %v826
    %v843 = vtanh.pop %v827
    %v844 = vtanh.pop %v828
    %v845 = vtanh.pop %v829
    %v846 = vtanh.pop %v830
    %v847 = vtanh.pop %v831
    %v848 = vmul.f32 %v832, 0.5
    %v849 = vmul.f32 %v833, 0.5
    %v850 = vmul.f32 %v834, 0.5
    %v851 = vmul.f32 %v835, 0.5
    %v852 = vmul.f32 %v836, 0.5
    %v853 = vmul.f32 %v837, 0.5
    %v854 = vmul.f32 %v838, 0.5
    %v855 = vmul.f32 %v839, 0.5
    %v856 = vmul.f32 %v840, 0.5
    %v857 = vmul.f32 %v841, 0.5
    %v858 = vmul.f32 %v842, 0.5
    %v859 = vmul.f32 %v843, 0.5
    %v860 = vmul.f32 %v844, 0.5
    %v861 = vmul.f32 %v845, 0.5
    %v862 = vmul.f32 %v846, 0.5
    %v863 = vmul.f32 %v847, 0.5
    %v864 = vadd.f32 %v848, 0.5
    %v865 = vadd.f32 %v849, 0.5
    %v866 = vadd.f32 %v850, 0.5
    %v867 = vadd.f32 %v851, 0.5
    %v868 = vadd.f32 %v852, 0.5
    %v869 = vadd.f32 %v853, 0.5
    %v870 = vadd.f32 %v854, 0.5
    %v871 = vadd.f32 %v855, 0.5
    %v872 = vadd.f32 %v856, 0.5
    %v873 = vadd.f32 %v857, 0.5
    %v874 = vadd.f32 %v858, 0.5
    %v875 = vadd.f32 %v859, 0.5
    %v876 = vadd.f32 %v860, 0.5
    %v877 = vadd.f32 %v861, 0.5
    %v878 = vadd.f32 %v862, 0.5
    %v879 = vadd.f32 %v863, 0.5
    %v880 = vmul.f32 %v770, %v864
    %v881 = vmul.f32 %v772, %v865
    %v882 = vmul.f32 %v776, %v866
    %v883 = vmul.f32 %v778, %v867
    %v884 = vmul.f32 %v782, %v868
    %v885 = vmul.f32 %v784, %v869
    %v886 = vmul.f32 %v788, %v870
    %v887 = vmul.f32 %v790, %v871
    %v888 = vmul.f32 %v794, %v872
    %v889 = vmul.f32 %v796, %v873
    %v890 = vmul.f32 %v800, %v874
    %v891 = vmul.f32 %v802, %v875
    %v892 = vmul.f32 %v806, %v876
    %v893 = vmul.f32 %v808, %v877
    %v894 = vmul.f32 %v812, %v878
    %v895 = vmul.f32 %v814, %v879
    %v896 = vld [vmem:[#allocation13] sm:$0xff]
    %v897 = vld [vmem:[#allocation13 + $0x8] sm:$0xff]
    %v898 = vld [vmem:[#allocation13 + $0x10] sm:$0xff]
    %v899 = vld [vmem:[#allocation13 + $0x18] sm:$0xff]
    %v900 = vld [vmem:[#allocation13 + $0x20] sm:$0xff]
    %v901 = vld [vmem:[#allocation13 + $0x28] sm:$0xff]
    %v902 = vld [vmem:[#allocation13 + $0x30] sm:$0xff]
    %v903 = vld [vmem:[#allocation13 + $0x38] sm:$0xff]
    %905 = vset.pattern.permute.xlu0 0
    %906 = vperm.xlu0 %905, %v896
    %v907 = vpop.permute.xlu0 %906
    %910 = vset.pattern.permute.xlu0 0
    %911 = vperm.xlu0 %910, %v897
    %v912 = vpop.permute.xlu0 %911
    %915 = vset.pattern.permute.xlu0 0
    %916 = vperm.xlu0 %915, %v898
    %v917 = vpop.permute.xlu0 %916
    %920 = vset.pattern.permute.xlu0 0
    %921 = vperm.xlu0 %920, %v899
    %v922 = vpop.permute.xlu0 %921
    %925 = vset.pattern.permute.xlu0 0
    %926 = vperm.xlu0 %925, %v900
    %v927 = vpop.permute.xlu0 %926
    %930 = vset.pattern.permute.xlu0 0
    %931 = vperm.xlu0 %930, %v901
    %v932 = vpop.permute.xlu0 %931
    %935 = vset.pattern.permute.xlu0 0
    %936 = vperm.xlu0 %935, %v902
    %v937 = vpop.permute.xlu0 %936
    %940 = vset.pattern.permute.xlu0 0
    %941 = vperm.xlu0 %940, %v903
    %v942 = vpop.permute.xlu0 %941
    %v944 = vmul.f32 %v880, %v907
    %v945 = vmul.f32 %v881, %v907
    %v946 = vmul.f32 %v882, %v912
    %v947 = vmul.f32 %v883, %v912
    %v948 = vmul.f32 %v884, %v917
    %v949 = vmul.f32 %v885, %v917
    %v950 = vmul.f32 %v886, %v922
    %v951 = vmul.f32 %v887, %v922
    %v952 = vmul.f32 %v888, %v927
    %v953 = vmul.f32 %v889, %v927
    %v954 = vmul.f32 %v890, %v932
    %v955 = vmul.f32 %v891, %v932
    %v956 = vmul.f32 %v892, %v937
    %v957 = vmul.f32 %v893, %v937
    %v958 = vmul.f32 %v894, %v942
    %v959 = vmul.f32 %v895, %v942
    %v960 = vadd.f32 %v944, %v946
    %v961 = vadd.f32 %v960, %v948
    %v962 = vadd.f32 %v961, %v950
    %v963 = vadd.f32 %v962, %v952
    %v964 = vadd.f32 %v963, %v954
    %v965 = vadd.f32 %v964, %v956
    %v966 = vadd.f32 %v965, %v958
    %v967 = vrot.slane %v966, 4
    %v968 = vadd.f32 %v966, %v967
    %v969 = vrot.slane %v968, 2
    %v970 = vadd.f32 %v968, %v969
    %v971 = vrot.slane %v970, 1
    %v972 = vadd.f32 %v970, %v971
    %v973 = vadd.f32 %v945, %v947
    %v974 = vadd.f32 %v973, %v949
    %v975 = vadd.f32 %v974, %v951
    %v976 = vadd.f32 %v975, %v953
    %v977 = vadd.f32 %v976, %v955
    %v978 = vadd.f32 %v977, %v957
    %v979 = vadd.f32 %v978, %v959
    %v980 = vrot.slane %v979, 4
    %v981 = vadd.f32 %v979, %v980
    %v982 = vrot.slane %v981, 2
    %v983 = vadd.f32 %v981, %v982
    %v984 = vrot.slane %v983, 1
    %v985 = vadd.f32 %v983, %v984
    %v986 = vld [vmem:[#allocation2] sm:$0x1]
    %988 = vset.pattern.permute.xlu0 0
    %989 = vperm.xlu0 %988, %v986
    %v990 = vpop.permute.xlu0 %989
    %v992 = vlaneseq
    %v993 = vshrl.u32 %v992, 7
    %v994 = vsub.s32 0, %v993
    %v995 = vrot.slane %v990, %v994
    %v996 = vadd.f32 %v972, %v995
    %v997 = vadd.f32 %v985, %v995
    %v1000 = vcombine.low %v996, %v997
    %v1002 = vunpack.c.l.s4 1966171168
    %v1003 = vunpack.c.0.s8 %v1002
    %v1004 = vlaneseq
    %v1005 = vshrl.u32 %v1004, 7
    %v1006 = vsub.s32 %v1003, %v1005
    %v1007 = vrot.slane %v1000, %v1006
    %v1009 = vunpack.c.l.s4 1966171168
    %v1010 = vunpack.c.0.s8 %v1009
    %v1011 = vlaneseq
    %v1012 = vshrl.u32 %v1011, 7
    %v1013 = vsub.s32 %v1010, %v1012
    %v1014 = vrot.slane %v1007, %v1013
    %v1016 = vlaneseq
    %vm1017 = vcmp.ge.s32.totalorder %v1016, 0
    %vm1018 = vcmp.lt.s32.totalorder %v1016, 256
    %vm1019 = vmand %vm1017, %vm1018
    %1020 = vst.msk [vmem:[%s9] sm:$0x3] %vm1019, %v1014
    // Predicated region
    $region66: #{_lambda_.1} parent=1 // pred_check
      _
    $region67: #{_lambda_.1} parent=1 // pred_check_branch
      %1022 = sbr.rel (0) target = $region69
    $region68: #{_lambda_.1} parent=1 // pred_region
      _
    $region69: #{_lambda_.1} parent=1 // pred_fallthru
      _
    // Predicated region
    $region70: #{_lambda_.1} parent=1 // pred_check
      _
    $region71: #{_lambda_.1} parent=1 // pred_check_branch
      %1024 = sbr.rel (0) target = $region73
    $region72: #{_lambda_.1} parent=1 // pred_region
      _
    $region73: #{_lambda_.1} parent=1 // pred_fallthru
      _
    %1025 = vsyncpa [#allocation4], 1
    %1026 = vsyncpa [#allocation6], 1
    %1027 = vsyncpa [#allocation9], 1
    %1028 = vsyncpa [#allocation12], 1

</llo_original>
